<compile_context>
chip_gen: v7x
topology: tpu7x:2x2x1
jax: 0.10.0
libtpu: 0.0.40
codegen_flags: <defaults>
</compile_context>

<pallas_src>
import functools
import numpy as np
import jax
import jax.numpy as jnp
from jax.experimental import pallas as pl
from jax.experimental.pallas import tpu as pltpu


# ----------------------- dependent function (dense NumPy) -------------------------
def calc_A_hat(adj_matrix: np.ndarray) -> np.ndarray:
    """Symmetrically normalized adjacency with self loops (dense float64)."""
    nnodes = adj_matrix.shape[0]
    A = np.asarray(adj_matrix, np.float64) + np.eye(nnodes, dtype=np.float64)
    D_vec = A.sum(axis=1)
    D_invsqrt = 1.0 / np.sqrt(D_vec)
    return (A * D_invsqrt[None, :]) * D_invsqrt[:, None]


def _round_up(x: int, m: int) -> int:
    return (x + m - 1) // m * m


def _pad_dim(d: int) -> int:
    # 128-lane dense; 256-aligned for larger dims (v6e/v7x MXU is 2x256^2).
    return 128 if d <= 128 else _round_up(d, 256)


def _vmem_capacity_bytes() -> int:
    try:
        return int(pltpu.get_tpu_info().vmem_capacity_bytes)
    except Exception:
        return 64 * 1024 * 1024      # v7x per-TC size; v5e/v6e have 128 MiB


# --------------------------------- Pallas kernel -----------------------------------
def _diffusion_horner_kernel(w_ref, a_ref, a_idx_ref, p_ref, p_idx_ref, o_ref,
                             r_ref, *, niter: int):
    """out[idx] = sum_i w_orig[i] * (A^i @ p)[idx], via a Horner recurrence.

    w_ref     : (niter,) f32 SMEM, *reversed* (w_ref[0] = weight of the highest power).
    a_ref     : (N_pad, N_pad) bf16 VMEM (zero-padded A_hat, resident, single copy).
    a_idx_ref : (I_pad, N_pad) bf16 VMEM (idx rows of A_hat, for the last step only).
    p_ref     : (N_pad, C_blk) f32 VMEM column block of padded local_preds.
    p_idx_ref : (I_pad, C_blk) f32 VMEM idx rows of the same column block.
    o_ref     : (I_pad, C_blk) f32 VMEM output block.
    r_ref     : (N_pad, C_blk) f32 VMEM scratch -- the Horner accumulator.
    """
    if niter == 1:
        o_ref[...] = w_ref[0] * p_idx_ref[...]
        return

    r_ref[...] = w_ref[0] * p_ref[...]
    # niter is small & static -> trace-time unroll; each step is one bf16 MXU matmul
    # (f32 accumulation).  p_ref is re-read per step (cheap vld) to bound live ranges.
    for j in range(1, niter - 1):
        r_ref[...] = (
            jnp.dot(a_ref[...], r_ref[...].astype(a_ref.dtype),
                    preferred_element_type=jnp.float32)
            + w_ref[j] * p_ref[...]
        )
    # Final step only needs the idx rows of A -> small matmul + small lane-dense store.
    o_ref[...] = (
        jnp.dot(a_idx_ref[...], r_ref[...].astype(a_idx_ref.dtype),
                preferred_element_type=jnp.float32)
        + w_ref[niter - 1] * p_idx_ref[...]
    )


# ---------------------------------- forward wrapper --------------------------------
@functools.partial(jax.jit, static_argnames=("niter",))
def diffusion_iteration_forward(weight, a_pad, local_preds, idx, *, niter: int):
    """weight: (1, niter) f32; a_pad: (N_pad, N_pad) bf16 zero-padded A_hat;
    local_preds: (N, C) f32; idx: (I,) int32 row indices.  Returns (I, C) f32."""
    N, C = local_preds.shape
    N_pad = a_pad.shape[0]
    I = idx.shape[0]
    I_pad = max(_round_up(I, 8), 8)
    C_pad = _pad_dim(C)
    C_blk = min(C_pad, 256)             # column block; >1 block -> v7x core-parallel
    a_item = jnp.dtype(a_pad.dtype).itemsize

    p_pad = jnp.pad(local_preds.astype(jnp.float32),
                    ((0, N_pad - N), (0, C_pad - C)))
    idx_pad = jnp.pad(idx.astype(jnp.int32), (0, I_pad - I))     # pad with row 0
    a_idx = a_pad[idx_pad]              # (I_pad, N_pad) idx rows for the last step
    p_idx = p_pad[idx_pad]              # (I_pad, C_pad)
    w_rev = jnp.flip(weight.astype(jnp.float32).reshape(-1))     # highest power first

    # VMEM budget: resident A + A[idx], f32 Horner scratch, double-buffered p/p_idx/out blocks.
    vmem_need = (a_item * (N_pad + I_pad) * N_pad
                 + 4 * N_pad * C_blk
                 + 2 * 4 * (N_pad + 2 * I_pad) * C_blk)
    vmem_limit = int(min(max(2 * vmem_need, 16 << 20),
                         int(0.9 * _vmem_capacity_bytes())))
    # TODO(synk): if 2*vmem_need exceeds per-core VMEM (very large graphs), fall back to a
    # (tm, tk)-tiled grid per Horner step: contraction axis innermost, A streamed as bf16
    # (tm, tk) blocks with pipeline_mode=pl.Buffered(2), tk ~ 512-1024, per-row-tile f32
    # accumulator scratch, row axis marked "parallel".

    out_pad = pl.pallas_call(
        functools.partial(_diffusion_horner_kernel, niter=niter),
        out_shape=jax.ShapeDtypeStruct((I_pad, C_pad), jnp.float32),
        grid_spec=pltpu.PrefetchScalarGridSpec(
            num_scalar_prefetch=0,
            grid=(C_pad // C_blk,),
            in_specs=[
                pl.BlockSpec(memory_space=pltpu.MemorySpace.SMEM),   # reversed weights
                pl.BlockSpec(memory_space=pltpu.MemorySpace.VMEM),   # A_hat (resident)
                pl.BlockSpec(memory_space=pltpu.MemorySpace.VMEM),   # A_hat[idx]
                pl.BlockSpec((N_pad, C_blk), lambda j: (0, j)),      # p column block
                pl.BlockSpec((I_pad, C_blk), lambda j: (0, j)),      # p[idx] block
            ],
            out_specs=pl.BlockSpec((I_pad, C_blk), lambda j: (0, j)),
            scratch_shapes=[pltpu.VMEM((N_pad, C_blk), jnp.float32)],
        ),
        compiler_params=pltpu.CompilerParams(
            dimension_semantics=("parallel",),
            vmem_limit_bytes=vmem_limit,
        ),
    )(w_rev, a_pad, a_idx, p_pad, p_idx)

    return out_pad[:I, :C]


class DiffusionIterationTPU:
    """Pallas/TPU port of the PyTorch DiffusionIteration module.

    The padded bf16 A_hat (a model constant) is built once here and cached across
    forward calls; only the tiny reversed-weight vector and the idx-row gathers are
    recomputed per call.
    """

    def __init__(self, adj_matrix, niter, *, a_dtype=jnp.bfloat16):
        self.niter = int(niter)
        A_hat = calc_A_hat(np.asarray(adj_matrix, np.float64))
        N = A_hat.shape[0]
        N_pad = _pad_dim(N)
        a = np.zeros((N_pad, N_pad), np.float32)
        a[:N, :N] = A_hat
        self.a_pad = jnp.asarray(a, dtype=a_dtype)      # cached device constant

    def __call__(self, weight, local_preds, idx):
        return diffusion_iteration_forward(weight, self.a_pad, local_preds, idx,
                                           niter=self.niter)


# ------------------------------------ reference ------------------------------------
def diffusion_iteration_ref(weight, adj_matrix, local_preds, idx, niter):
    """Float64 NumPy replica of the PyTorch forward (explicit D_mat powers)."""
    A_hat = calc_A_hat(np.asarray(adj_matrix, np.float64))
    N, C = local_preds.shape
    D_mat = np.zeros((niter, N, N), dtype=np.float64)
    D_mat[0] = np.eye(N)
    for i in range(1, niter):
        D_mat[i] = D_mat[i - 1] @ A_hat
    prop = D_mat @ np.asarray(local_preds, np.float64)               # (niter, N, C)
    out = (np.asarray(weight, np.float64) @ prop.reshape(niter, -1)).reshape(N, C)
    return out[np.asarray(idx)]


# -------------------------------------- main ---------------------------------------
if __name__ == "__main__":
    N, C, niter = 16, 8, 5

    key = jax.random.PRNGKey(0)
    k_adj, k_w, k_p = jax.random.split(key, 3)

    # deterministic synthetic symmetric adjacency (no self loops)
    upper = (jax.random.uniform(k_adj, (N, N)) < 0.3).astype(jnp.float32)
    upper = jnp.triu(upper, 1)
    adj = np.asarray(upper + upper.T, np.float64)

    bound = float(np.sqrt(6.0 / (niter + 1)))        # xavier_uniform_ on (1, niter)
    weight = jax.random.uniform(k_w, (1, niter), minval=-bound, maxval=bound,
                                dtype=jnp.float32)
    local_preds = jax.random.normal(k_p, (N, C), dtype=jnp.float32)
    idx = jnp.array([0, 3, 5, 7, 12], dtype=jnp.int32)

    model = DiffusionIterationTPU(adj, niter)
    out = model(weight, local_preds, idx)
    out = jax.block_until_ready(out)

    ref = diffusion_iteration_ref(np.asarray(weight), adj, np.asarray(local_preds),
                                  np.asarray(idx), niter)
    # bf16 A_hat + bf16 MXU inputs in the Horner recurrence give a few e-3 of error vs
    # the float64 spec reference; this tolerance checks semantics, not bit-exactness.
    np.testing.assert_allclose(np.asarray(out), ref, rtol=5e-2, atol=5e-2)

    print("KERNEL_OK")
</pallas_src>

<mosaic_0001>
module attributes {stable_mosaic.version = 11 : i64} {
  func.func @_diffusion_horner_kernel(%arg0: i32, %arg1: memref<5xf32, #tpu.memory_space<smem>>, %arg2: memref<128x128xbf16, #tpu.memory_space<vmem>>, %arg3: memref<8x128xbf16, #tpu.memory_space<vmem>>, %arg4: memref<128x128xf32, #tpu.memory_space<vmem>>, %arg5: memref<8x128xf32, #tpu.memory_space<vmem>>, %arg6: memref<8x128xf32, #tpu.memory_space<vmem>>, %arg7: memref<128x128xf32, #tpu.memory_space<vmem>>) attributes {dimension_semantics = [#tpu.dimension_semantics<parallel>], iteration_bounds = array<i64: 1>, scalar_prefetch = 0 : i64, scratch_operands = 1 : i64, tpu.core_type = #tpu.core_type<tc>, window_params = [{transform_indices = @transform_0, window_bounds = array<i64: 5>}, {pipeline_mode = #tpu.pipeline_mode<synchronous>, transform_indices = @transform_1, window_bounds = array<i64: 128, 128>}, {pipeline_mode = #tpu.pipeline_mode<synchronous>, transform_indices = @transform_2, window_bounds = array<i64: 8, 128>}, {transform_indices = @transform_3, window_bounds = array<i64: 128, 128>}, {transform_indices = @transform_4, window_bounds = array<i64: 8, 128>}, {transform_indices = @transform_5, window_bounds = array<i64: 8, 128>}]} {
    %c0 = arith.constant 0 : index
    %0 = memref.load %arg1[%c0] : memref<5xf32, #tpu.memory_space<smem>>
    %c0_0 = arith.constant 0 : index
    %c0_1 = arith.constant 0 : index
    %1 = vector.load %arg4[%c0_0, %c0_1] : memref<128x128xf32, #tpu.memory_space<vmem>>, vector<128x128xf32>
    %2 = vector.broadcast %0 : f32 to vector<128x128xf32>
    %3 = arith.mulf %2, %1 : vector<128x128xf32>
    %c0_2 = arith.constant 0 : index
    %c0_3 = arith.constant 0 : index
    %4 = vector.load %arg7[%c0_2, %c0_3] : memref<128x128xf32, #tpu.memory_space<vmem>>, vector<128x128xf32>
    tpu.vector_store %arg7[%c0_2, %c0_3], %3 {strides = array<i32>} : memref<128x128xf32, #tpu.memory_space<vmem>>, vector<128x128xf32>,
    %c0_4 = arith.constant 0 : index
    %c0_5 = arith.constant 0 : index
    %5 = vector.load %arg2[%c0_4, %c0_5] : memref<128x128xbf16, #tpu.memory_space<vmem>>, vector<128x128xbf16>
    %c0_6 = arith.constant 0 : index
    %c0_7 = arith.constant 0 : index
    %6 = vector.load %arg7[%c0_6, %c0_7] : memref<128x128xf32, #tpu.memory_space<vmem>>, vector<128x128xf32>
    %7 = arith.truncf %6 : vector<128x128xf32> to vector<128x128xbf16>
    %cst = arith.constant dense<0.000000e+00> : vector<128x128xf32>
    %8 = tpu.matmul %5, %7, %cst {dimension_numbers = #tpu.dot_dimension_numbers<[1], [0], [0], [1], [0, 0, 1, 1], [], []>} : vector<128x128xbf16>, vector<128x128xbf16>, vector<128x128xf32> -> vector<128x128xf32>
    %c1 = arith.constant 1 : index
    %9 = memref.load %arg1[%c1] : memref<5xf32, #tpu.memory_space<smem>>
    %c0_8 = arith.constant 0 : index
    %c0_9 = arith.constant 0 : index
    %10 = vector.load %arg4[%c0_8, %c0_9] : memref<128x128xf32, #tpu.memory_space<vmem>>, vector<128x128xf32>
    %11 = vector.broadcast %9 : f32 to vector<128x128xf32>
    %12 = arith.mulf %11, %10 : vector<128x128xf32>
    %13 = arith.addf %8, %12 : vector<128x128xf32>
    %c0_10 = arith.constant 0 : index
    %c0_11 = arith.constant 0 : index
    %14 = vector.load %arg7[%c0_10, %c0_11] : memref<128x128xf32, #tpu.memory_space<vmem>>, vector<128x128xf32>
    tpu.vector_store %arg7[%c0_10, %c0_11], %13 {strides = array<i32>} : memref<128x128xf32, #tpu.memory_space<vmem>>, vector<128x128xf32>,
    %c0_12 = arith.constant 0 : index
    %c0_13 = arith.constant 0 : index
    %15 = vector.load %arg2[%c0_12, %c0_13] : memref<128x128xbf16, #tpu.memory_space<vmem>>, vector<128x128xbf16>
    %c0_14 = arith.constant 0 : index
    %c0_15 = arith.constant 0 : index
    %16 = vector.load %arg7[%c0_14, %c0_15] : memref<128x128xf32, #tpu.memory_space<vmem>>, vector<128x128xf32>
    %17 = arith.truncf %16 : vector<128x128xf32> to vector<128x128xbf16>
    %cst_16 = arith.constant dense<0.000000e+00> : vector<128x128xf32>
    %18 = tpu.matmul %15, %17, %cst_16 {dimension_numbers = #tpu.dot_dimension_numbers<[1], [0], [0], [1], [0, 0, 1, 1], [], []>} : vector<128x128xbf16>, vector<128x128xbf16>, vector<128x128xf32> -> vector<128x128xf32>
    %c2 = arith.constant 2 : index
    %19 = memref.load %arg1[%c2] : memref<5xf32, #tpu.memory_space<smem>>
    %c0_17 = arith.constant 0 : index
    %c0_18 = arith.constant 0 : index
    %20 = vector.load %arg4[%c0_17, %c0_18] : memref<128x128xf32, #tpu.memory_space<vmem>>, vector<128x128xf32>
    %21 = vector.broadcast %19 : f32 to vector<128x128xf32>
    %22 = arith.mulf %21, %20 : vector<128x128xf32>
    %23 = arith.addf %18, %22 : vector<128x128xf32>
    %c0_19 = arith.constant 0 : index
    %c0_20 = arith.constant 0 : index
    %24 = vector.load %arg7[%c0_19, %c0_20] : memref<128x128xf32, #tpu.memory_space<vmem>>, vector<128x128xf32>
    tpu.vector_store %arg7[%c0_19, %c0_20], %23 {strides = array<i32>} : memref<128x128xf32, #tpu.memory_space<vmem>>, vector<128x128xf32>,
    %c0_21 = arith.constant 0 : index
    %c0_22 = arith.constant 0 : index
    %25 = vector.load %arg2[%c0_21, %c0_22] : memref<128x128xbf16, #tpu.memory_space<vmem>>, vector<128x128xbf16>
    %c0_23 = arith.constant 0 : index
    %c0_24 = arith.constant 0 : index
    %26 = vector.load %arg7[%c0_23, %c0_24] : memref<128x128xf32, #tpu.memory_space<vmem>>, vector<128x128xf32>
    %27 = arith.truncf %26 : vector<128x128xf32> to vector<128x128xbf16>
    %cst_25 = arith.constant dense<0.000000e+00> : vector<128x128xf32>
    %28 = tpu.matmul %25, %27, %cst_25 {dimension_numbers = #tpu.dot_dimension_numbers<[1], [0], [0], [1], [0, 0, 1, 1], [], []>} : vector<128x128xbf16>, vector<128x128xbf16>, vector<128x128xf32> -> vector<128x128xf32>
    %c3 = arith.constant 3 : index
    %29 = memref.load %arg1[%c3] : memref<5xf32, #tpu.memory_space<smem>>
    %c0_26 = arith.constant 0 : index
    %c0_27 = arith.constant 0 : index
    %30 = vector.load %arg4[%c0_26, %c0_27] : memref<128x128xf32, #tpu.memory_space<vmem>>, vector<128x128xf32>
    %31 = vector.broadcast %29 : f32 to vector<128x128xf32>
    %32 = arith.mulf %31, %30 : vector<128x128xf32>
    %33 = arith.addf %28, %32 : vector<128x128xf32>
    %c0_28 = arith.constant 0 : index
    %c0_29 = arith.constant 0 : index
    %34 = vector.load %arg7[%c0_28, %c0_29] : memref<128x128xf32, #tpu.memory_space<vmem>>, vector<128x128xf32>
    tpu.vector_store %arg7[%c0_28, %c0_29], %33 {strides = array<i32>} : memref<128x128xf32, #tpu.memory_space<vmem>>, vector<128x128xf32>,
    %c0_30 = arith.constant 0 : index
    %c0_31 = arith.constant 0 : index
    %35 = vector.load %arg3[%c0_30, %c0_31] : memref<8x128xbf16, #tpu.memory_space<vmem>>, vector<8x128xbf16>
    %c0_32 = arith.constant 0 : index
    %c0_33 = arith.constant 0 : index
    %36 = vector.load %arg7[%c0_32, %c0_33] : memref<128x128xf32, #tpu.memory_space<vmem>>, vector<128x128xf32>
    %37 = arith.truncf %36 : vector<128x128xf32> to vector<128x128xbf16>
    %cst_34 = arith.constant dense<0.000000e+00> : vector<8x128xf32>
    %38 = tpu.matmul %35, %37, %cst_34 {dimension_numbers = #tpu.dot_dimension_numbers<[1], [0], [0], [1], [0, 0, 1, 1], [], []>} : vector<8x128xbf16>, vector<128x128xbf16>, vector<8x128xf32> -> vector<8x128xf32>
    %c4 = arith.constant 4 : index
    %39 = memref.load %arg1[%c4] : memref<5xf32, #tpu.memory_space<smem>>
    %c0_35 = arith.constant 0 : index
    %c0_36 = arith.constant 0 : index
    %40 = vector.load %arg5[%c0_35, %c0_36] : memref<8x128xf32, #tpu.memory_space<vmem>>, vector<8x128xf32>
    %41 = vector.broadcast %39 : f32 to vector<8x128xf32>
    %42 = arith.mulf %41, %40 : vector<8x128xf32>
    %43 = arith.addf %38, %42 : vector<8x128xf32>
    %c0_37 = arith.constant 0 : index
    %c0_38 = arith.constant 0 : index
    %44 = vector.load %arg6[%c0_37, %c0_38] : memref<8x128xf32, #tpu.memory_space<vmem>>, vector<8x128xf32>
    tpu.vector_store %arg6[%c0_37, %c0_38], %43 {strides = array<i32>} : memref<8x128xf32, #tpu.memory_space<vmem>>, vector<8x128xf32>,
    return
  }
  func.func @transform_0(%arg0: i32) -> i32 {
    %c0_i32 = arith.constant 0 : i32
    %c0_i32_0 = arith.constant 0 : i32
    return %c0_i32 : i32
  }
  func.func @transform_1(%arg0: i32) -> (i32, i32) {
    %c0_i32 = arith.constant 0 : i32
    %c0_i32_0 = arith.constant 0 : i32
    %c0_i32_1 = arith.constant 0 : i32
    return %c0_i32, %c0_i32_0 : i32, i32
  }
  func.func @transform_2(%arg0: i32) -> (i32, i32) {
    %c0_i32 = arith.constant 0 : i32
    %c0_i32_0 = arith.constant 0 : i32
    %c0_i32_1 = arith.constant 0 : i32
    return %c0_i32, %c0_i32_0 : i32, i32
  }
  func.func @transform_3(%arg0: i32) -> (i32, i32) {
    %c0_i32 = arith.constant 0 : i32
    %c0_i32_0 = arith.constant 0 : i32
    return %c0_i32, %arg0 : i32, i32
  }
  func.func @transform_4(%arg0: i32) -> (i32, i32) {
    %c0_i32 = arith.constant 0 : i32
    %c0_i32_0 = arith.constant 0 : i32
    return %c0_i32, %arg0 : i32, i32
  }
  func.func @transform_5(%arg0: i32) -> (i32, i32) {
    %c0_i32 = arith.constant 0 : i32
    %c0_i32_0 = arith.constant 0 : i32
    return %c0_i32, %arg0 : i32, i32
  }
}

</mosaic_0001>

<llo_original>
// kernel: diffusion_iteration_forward.1
$region0: #{diffusion_iteration_forward.1}
  #allocation0 [shape = 'u32[]', space=smem, size = 0x4, offset = 0x4, fixed_abs, tag = 'smem constant byte address 0x4 - core index']
  #allocation1 [shape = 'u32[144,128]{1,0:T(1,128)}', space=vmem, size = 0x12000, scoped, tag = 'internal scratch']
  #allocation2 [shape = 'f32[128,128]{1,0:T(8,128)}', space=vmem, size = 0x10000, scoped, tag = 'scratch operand']
  %s0 = inlined_call_operand.vmem [shape: f32[5], index: 0, kind: input, shape index: {}]
  %s1 = inlined_call_operand.vmem [shape: bf16[128,128], index: 1, kind: input, shape index: {}]
  %s2 = inlined_call_operand.vmem [shape: bf16[8,128], index: 2, kind: input, shape index: {}]
  %s3 = inlined_call_operand.vmem [shape: f32[128,128], index: 3, kind: input, shape index: {}]
  %s4 = inlined_call_operand.vmem [shape: f32[8,128], index: 4, kind: input, shape index: {}]
  %s5 = inlined_call_operand.hbm [shape: f32[8,128], index: 5, kind: output, shape index: {}]
  %s6 = sld [smem:[#allocation0]]
  $region34: #{diffusion_iteration_forward.1} parent=0
    _
  %s8 = ssub.s32 1, %s6
  %s9 = scalar_select 0, %s8, %s6
  $region1: #{diffusion_iteration_forward.1} parent=0
    #allocation3 [shape = 'u8[512]{0}', space=smem, size = 0x200, scoped, tag = 'input window, operand 0, single buffered']
    #allocation4 [shape = 's32[1]{0}', space=sflag, size = 0x4, scoped, tag = 'scoped memory for diffusion_iteration_forward.1']
    #allocation5 [shape = 's32[1]{0}', space=sflag, size = 0x4, scoped, tag = 'scoped memory for diffusion_iteration_forward.1']
    #allocation6 [shape = 'u8[4096]{0}', space=vmem, size = 0x1000, scoped, tag = 'output window, operand 0, single buffered']
    %10 = vsyncpa [#allocation5], 0
    %11 = vsyncpa [#allocation4], 0
    // Predicated region
    $region2: #{diffusion_iteration_forward.1} parent=1 // pred_check
      _
    $region3: #{diffusion_iteration_forward.1} parent=1 // pred_check_branch
      %13 = sbr.rel (0) target = $region5
    $region4: #{diffusion_iteration_forward.1} parent=1 // pred_region
      %s15 = ssub.s32 16, 16
      %16 = vsyncadd [#allocation5], %s15
      %s18 = sshll.u32 %s0, 4
      %s19 = int_to_ptr.vmem [resolvable:$true] %s18
      %21 = dma.vmem_to_smem %s19, 16, [#allocation3], [#allocation5]
    $region5: #{diffusion_iteration_forward.1} parent=1 // pred_fallthru
      _
    // Predicated region
    $region6: #{diffusion_iteration_forward.1} parent=1 // pred_check
      _
    $region7: #{diffusion_iteration_forward.1} parent=1 // pred_check_branch
      %23 = sbr.rel (0) target = $region9
    $region8: #{diffusion_iteration_forward.1} parent=1 // pred_region
      _
    $region9: #{diffusion_iteration_forward.1} parent=1 // pred_fallthru
      _
    // Predicated region
    $region10: #{diffusion_iteration_forward.1} parent=1 // pred_check
      _
    $region11: #{diffusion_iteration_forward.1} parent=1 // pred_check_branch
      %25 = sbr.rel (0) target = $region13
    $region12: #{diffusion_iteration_forward.1} parent=1 // pred_region
      _
    $region13: #{diffusion_iteration_forward.1} parent=1 // pred_fallthru
      _
    // Predicated region
    $region14: #{diffusion_iteration_forward.1} parent=1 // pred_check
      _
    $region15: #{diffusion_iteration_forward.1} parent=1 // pred_check_branch
      %27 = sbr.rel (0) target = $region17
    $region16: #{diffusion_iteration_forward.1} parent=1 // pred_region
      _
    $region17: #{diffusion_iteration_forward.1} parent=1 // pred_fallthru
      _
    // Predicated region
    $region18: #{diffusion_iteration_forward.1} parent=1 // pred_check
      _
    $region19: #{diffusion_iteration_forward.1} parent=1 // pred_check_branch
      %29 = sbr.rel (0) target = $region21
    $region20: #{diffusion_iteration_forward.1} parent=1 // pred_region
      _
    $region21: #{diffusion_iteration_forward.1} parent=1 // pred_fallthru
      _
    // Predicated region
    $region22: #{diffusion_iteration_forward.1} parent=1 // pred_check
      _
    $region23: #{diffusion_iteration_forward.1} parent=1 // pred_check_branch
      %31 = sbr.rel (0) target = $region25
    $region24: #{diffusion_iteration_forward.1} parent=1 // pred_region
      %32 = dma.done [#allocation5], 16
    $region25: #{diffusion_iteration_forward.1} parent=1 // pred_fallthru
      _
    %33 = sfence
    %s35 = sld [smem:[#allocation3]]
    %v36 = vld [vmem:[%s3] sm:$0xff]
    %v37 = vld [vmem:[%s3 + $0x8] sm:$0xff]
    %v38 = vld [vmem:[%s3 + $0x10] sm:$0xff]
    %v39 = vld [vmem:[%s3 + $0x18] sm:$0xff]
    %v40 = vld [vmem:[%s3 + $0x20] sm:$0xff]
    %v41 = vld [vmem:[%s3 + $0x28] sm:$0xff]
    %v42 = vld [vmem:[%s3 + $0x30] sm:$0xff]
    %v43 = vld [vmem:[%s3 + $0x38] sm:$0xff]
    %v44 = vld [vmem:[%s3 + $0x40] sm:$0xff]
    %v45 = vld [vmem:[%s3 + $0x48] sm:$0xff]
    %v46 = vld [vmem:[%s3 + $0x50] sm:$0xff]
    %v47 = vld [vmem:[%s3 + $0x58] sm:$0xff]
    %v48 = vld [vmem:[%s3 + $0x60] sm:$0xff]
    %v49 = vld [vmem:[%s3 + $0x68] sm:$0xff]
    %v50 = vld [vmem:[%s3 + $0x70] sm:$0xff]
    %v51 = vld [vmem:[%s3 + $0x78] sm:$0xff]
    %v52 = vstv %s35
    %v53 = vmul.f32 %v52, %v36
    %v54 = vmul.f32 %v52, %v37
    %v55 = vmul.f32 %v52, %v38
    %v56 = vmul.f32 %v52, %v39
    %v57 = vmul.f32 %v52, %v40
    %v58 = vmul.f32 %v52, %v41
    %v59 = vmul.f32 %v52, %v42
    %v60 = vmul.f32 %v52, %v43
    %v61 = vmul.f32 %v52, %v44
    %v62 = vmul.f32 %v52, %v45
    %v63 = vmul.f32 %v52, %v46
    %v64 = vmul.f32 %v52, %v47
    %v65 = vmul.f32 %v52, %v48
    %v66 = vmul.f32 %v52, %v49
    %v67 = vmul.f32 %v52, %v50
    %v68 = vmul.f32 %v52, %v51
    %69 = vst [vmem:[#allocation2] sm:$0xff] %v53
    %70 = vst [vmem:[#allocation2 + $0x8] sm:$0xff] %v54
    %71 = vst [vmem:[#allocation2 + $0x10] sm:$0xff] %v55
    %72 = vst [vmem:[#allocation2 + $0x18] sm:$0xff] %v56
    %73 = vst [vmem:[#allocation2 + $0x20] sm:$0xff] %v57
    %74 = vst [vmem:[#allocation2 + $0x28] sm:$0xff] %v58
    %75 = vst [vmem:[#allocation2 + $0x30] sm:$0xff] %v59
    %76 = vst [vmem:[#allocation2 + $0x38] sm:$0xff] %v60
    %77 = vst [vmem:[#allocation2 + $0x40] sm:$0xff] %v61
    %78 = vst [vmem:[#allocation2 + $0x48] sm:$0xff] %v62
    %79 = vst [vmem:[#allocation2 + $0x50] sm:$0xff] %v63
    %80 = vst [vmem:[#allocation2 + $0x58] sm:$0xff] %v64
    %81 = vst [vmem:[#allocation2 + $0x60] sm:$0xff] %v65
    %82 = vst [vmem:[#allocation2 + $0x68] sm:$0xff] %v66
    %83 = vst [vmem:[#allocation2 + $0x70] sm:$0xff] %v67
    %84 = vst [vmem:[#allocation2 + $0x78] sm:$0xff] %v68
    %v85 = vld [vmem:[%s1] sm:$0xf]
    %v86 = vld [vmem:[%s1 + $0x4] sm:$0xf]
    %v87 = vld [vmem:[%s1 + $0x8] sm:$0xf]
    %v88 = vld [vmem:[%s1 + $0xc] sm:$0xf]
    %v89 = vld [vmem:[%s1 + $0x10] sm:$0xf]
    %v90 = vld [vmem:[%s1 + $0x14] sm:$0xf]
    %v91 = vld [vmem:[%s1 + $0x18] sm:$0xf]
    %v92 = vld [vmem:[%s1 + $0x1c] sm:$0xf]
    %v93 = vld [vmem:[%s1 + $0x20] sm:$0xf]
    %v94 = vld [vmem:[%s1 + $0x24] sm:$0xf]
    %v95 = vld [vmem:[%s1 + $0x28] sm:$0xf]
    %v96 = vld [vmem:[%s1 + $0x2c] sm:$0xf]
    %v97 = vld [vmem:[%s1 + $0x30] sm:$0xf]
    %v98 = vld [vmem:[%s1 + $0x34] sm:$0xf]
    %v99 = vld [vmem:[%s1 + $0x38] sm:$0xf]
    %v100 = vld [vmem:[%s1 + $0x3c] sm:$0xf]
    %v101 = vld [vmem:[#allocation2] sm:$0xff]
    %v102 = vld [vmem:[#allocation2 + $0x8] sm:$0xff]
    %v103 = vld [vmem:[#allocation2 + $0x10] sm:$0xff]
    %v104 = vld [vmem:[#allocation2 + $0x18] sm:$0xff]
    %v105 = vld [vmem:[#allocation2 + $0x20] sm:$0xff]
    %v106 = vld [vmem:[#allocation2 + $0x28] sm:$0xff]
    %v107 = vld [vmem:[#allocation2 + $0x30] sm:$0xff]
    %v108 = vld [vmem:[#allocation2 + $0x38] sm:$0xff]
    %v109 = vld [vmem:[#allocation2 + $0x40] sm:$0xff]
    %v110 = vld [vmem:[#allocation2 + $0x48] sm:$0xff]
    %v111 = vld [vmem:[#allocation2 + $0x50] sm:$0xff]
    %v112 = vld [vmem:[#allocation2 + $0x58] sm:$0xff]
    %v113 = vld [vmem:[#allocation2 + $0x60] sm:$0xff]
    %v114 = vld [vmem:[#allocation2 + $0x68] sm:$0xff]
    %v115 = vld [vmem:[#allocation2 + $0x70] sm:$0xff]
    %v116 = vld [vmem:[#allocation2 + $0x78] sm:$0xff]
    %v117 = vpack.c.bf16 %v102, %v101
    %v118 = vpack.c.bf16 %v104, %v103
    %v119 = vpack.c.bf16 %v106, %v105
    %v120 = vpack.c.bf16 %v108, %v107
    %v121 = vpack.c.bf16 %v110, %v109
    %v122 = vpack.c.bf16 %v112, %v111
    %v123 = vpack.c.bf16 %v114, %v113
    %v124 = vpack.c.bf16 %v116, %v115
    %s125 = sld [smem:[#allocation3 + $0x1]]
    %v126 = vld [vmem:[%s3] sm:$0xff]
    %v127 = vld [vmem:[%s3 + $0x8] sm:$0xff]
    %v128 = vld [vmem:[%s3 + $0x10] sm:$0xff]
    %v129 = vld [vmem:[%s3 + $0x18] sm:$0xff]
    %v130 = vld [vmem:[%s3 + $0x20] sm:$0xff]
    %v131 = vld [vmem:[%s3 + $0x28] sm:$0xff]
    %v132 = vld [vmem:[%s3 + $0x30] sm:$0xff]
    %v133 = vld [vmem:[%s3 + $0x38] sm:$0xff]
    %v134 = vld [vmem:[%s3 + $0x40] sm:$0xff]
    %v135 = vld [vmem:[%s3 + $0x48] sm:$0xff]
    %v136 = vld [vmem:[%s3 + $0x50] sm:$0xff]
    %v137 = vld [vmem:[%s3 + $0x58] sm:$0xff]
    %v138 = vld [vmem:[%s3 + $0x60] sm:$0xff]
    %v139 = vld [vmem:[%s3 + $0x68] sm:$0xff]
    %v140 = vld [vmem:[%s3 + $0x70] sm:$0xff]
    %v141 = vld [vmem:[%s3 + $0x78] sm:$0xff]
    %v142 = vstv %s125
    %v143 = vmul.f32 %v142, %v126
    %v144 = vmul.f32 %v142, %v127
    %v145 = vmul.f32 %v142, %v128
    %v146 = vmul.f32 %v142, %v129
    %v147 = vmul.f32 %v142, %v130
    %v148 = vmul.f32 %v142, %v131
    %v149 = vmul.f32 %v142, %v132
    %v150 = vmul.f32 %v142, %v133
    %v151 = vmul.f32 %v142, %v134
    %v152 = vmul.f32 %v142, %v135
    %v153 = vmul.f32 %v142, %v136
    %v154 = vmul.f32 %v142, %v137
    %v155 = vmul.f32 %v142, %v138
    %v156 = vmul.f32 %v142, %v139
    %v157 = vmul.f32 %v142, %v140
    %v158 = vmul.f32 %v142, %v141
    %v175 = vunpack.c.l.b16 %v85
    %v176 = vunpack.c.l.b16 %v86
    %v177 = vunpack.c.l.b16 %v87
    %v178 = vunpack.c.l.b16 %v88
    %v179 = vunpack.c.l.b16 %v89
    %v180 = vunpack.c.l.b16 %v90
    %v181 = vunpack.c.l.b16 %v91
    %v182 = vunpack.c.l.b16 %v92
    %v183 = vunpack.c.l.b16 %v93
    %v184 = vunpack.c.l.b16 %v94
    %v185 = vunpack.c.l.b16 %v95
    %v186 = vunpack.c.l.b16 %v96
    %v187 = vunpack.c.l.b16 %v97
    %v188 = vunpack.c.l.b16 %v98
    %v189 = vunpack.c.l.b16 %v99
    %v190 = vunpack.c.l.b16 %v100
    %v191 = vpack.c.b16 %v176, %v175
    %v192 = vpack.c.b16 %v178, %v177
    %v193 = vpack.c.b16 %v180, %v179
    %v194 = vpack.c.b16 %v182, %v181
    %v195 = vpack.c.b16 %v184, %v183
    %v196 = vpack.c.b16 %v186, %v185
    %v197 = vpack.c.b16 %v188, %v187
    %v198 = vpack.c.b16 %v190, %v189
    %207 = vmatprep.subr.bf16.mxu0 0
    %208 = vmatpush1.bf16.msra.mxu0 %v117
    %209 = vmatprep.subr.bf16.mxu0 0
    %210 = vmatpush1.bf16.msra.mxu0 %v118
    %211 = vmatprep.subr.bf16.mxu0 0
    %212 = vmatpush1.bf16.msra.mxu0 %v119
    %213 = vmatprep.subr.bf16.mxu0 0
    %214 = vmatpush1.bf16.msra.mxu0 %v120
    %215 = vmatprep.subr.bf16.mxu0 0
    %216 = vmatpush1.bf16.msra.mxu0 %v121
    %217 = vmatprep.subr.bf16.mxu0 0
    %218 = vmatpush1.bf16.msra.mxu0 %v122
    %219 = vmatprep.subr.bf16.mxu0 0
    %220 = vmatpush1.bf16.msra.mxu0 %v123
    %221 = vmatprep.subr.bf16.mxu0 0
    %222 = vmatpush1.bf16.msra.mxu0 %v124
    %223 = vmatprep.subr.bf16.mxu0 0
    %224 = vmatpush1.bf16.msra.mxu0 0
    %225 = vmatprep.subr.bf16.mxu0 0
    %226 = vmatpush1.bf16.msra.mxu0 0
    %227 = vmatprep.subr.bf16.mxu0 0
    %228 = vmatpush1.bf16.msra.mxu0 0
    %229 = vmatprep.subr.bf16.mxu0 0
    %230 = vmatpush1.bf16.msra.mxu0 0
    %231 = vmatprep.subr.bf16.mxu0 0
    %232 = vmatpush1.bf16.msra.mxu0 0
    %233 = vmatprep.subr.bf16.mxu0 0
    %234 = vmatpush1.bf16.msra.mxu0 0
    %235 = vmatprep.subr.bf16.mxu0 0
    %236 = vmatpush1.bf16.msra.mxu0 0
    %237 = vmatprep.subr.bf16.mxu0 0
    %238 = vmatpush1.bf16.msra.mxu0 0
    %239 = vmatprep.mubr.bf16.mxu0 0
    %240 = vmatmul.mubr.bf16.gmra.mrb[0].mxu0 %v191
    %v241 = vpop.f32.mrb[0].mxu0
    %v242 = vadd.f32 %v143, %v241
    %v243 = vpop.f32.mrb[0].mxu0
    %v244 = vpop.f32.mrb[0].mxu0
    %v245 = vadd.f32 %v144, %v244
    %v246 = vpop.f32.mrb[0].mxu0
    %247 = vmatprep.mubr.bf16.mxu0 0
    %248 = vmatmul.mubr.bf16.gmra.mrb[0].mxu0 %v192
    %v249 = vpop.f32.mrb[0].mxu0
    %v250 = vadd.f32 %v145, %v249
    %v251 = vpop.f32.mrb[0].mxu0
    %v252 = vpop.f32.mrb[0].mxu0
    %v253 = vadd.f32 %v146, %v252
    %v254 = vpop.f32.mrb[0].mxu0
    %255 = vmatprep.mubr.bf16.mxu0 0
    %256 = vmatmul.mubr.bf16.gmra.mrb[0].mxu0 %v193
    %v257 = vpop.f32.mrb[0].mxu0
    %v258 = vadd.f32 %v147, %v257
    %v259 = vpop.f32.mrb[0].mxu0
    %v260 = vpop.f32.mrb[0].mxu0
    %v261 = vadd.f32 %v148, %v260
    %v262 = vpop.f32.mrb[0].mxu0
    %263 = vmatprep.mubr.bf16.mxu0 0
    %264 = vmatmul.mubr.bf16.gmra.mrb[0].mxu0 %v194
    %v265 = vpop.f32.mrb[0].mxu0
    %v266 = vadd.f32 %v149, %v265
    %v267 = vpop.f32.mrb[0].mxu0
    %v268 = vpop.f32.mrb[0].mxu0
    %v269 = vadd.f32 %v150, %v268
    %v270 = vpop.f32.mrb[0].mxu0
    %271 = vmatprep.mubr.bf16.mxu0 0
    %272 = vmatmul.mubr.bf16.gmra.mrb[0].mxu0 %v195
    %v273 = vpop.f32.mrb[0].mxu0
    %v274 = vadd.f32 %v151, %v273
    %v275 = vpop.f32.mrb[0].mxu0
    %v276 = vpop.f32.mrb[0].mxu0
    %v277 = vadd.f32 %v152, %v276
    %v278 = vpop.f32.mrb[0].mxu0
    %279 = vmatprep.mubr.bf16.mxu0 0
    %280 = vmatmul.mubr.bf16.gmra.mrb[0].mxu0 %v196
    %v281 = vpop.f32.mrb[0].mxu0
    %v282 = vadd.f32 %v153, %v281
    %v283 = vpop.f32.mrb[0].mxu0
    %v284 = vpop.f32.mrb[0].mxu0
    %v285 = vadd.f32 %v154, %v284
    %v286 = vpop.f32.mrb[0].mxu0
    %287 = vmatprep.mubr.bf16.mxu0 0
    %288 = vmatmul.mubr.bf16.gmra.mrb[0].mxu0 %v197
    %v289 = vpop.f32.mrb[0].mxu0
    %v290 = vadd.f32 %v155, %v289
    %v291 = vpop.f32.mrb[0].mxu0
    %v292 = vpop.f32.mrb[0].mxu0
    %v293 = vadd.f32 %v156, %v292
    %v294 = vpop.f32.mrb[0].mxu0
    %295 = vmatprep.mubr.bf16.mxu0 0
    %296 = vmatmul.mubr.bf16.gmra.mrb[0].mxu0 %v198
    %v297 = vpop.f32.mrb[0].mxu0
    %v298 = vadd.f32 %v157, %v297
    %v299 = vpop.f32.mrb[0].mxu0
    %v300 = vpop.f32.mrb[0].mxu0
    %v301 = vadd.f32 %v158, %v300
    %v302 = vpop.f32.mrb[0].mxu0
    %303 = vdwg.mxu0
    %304 = vst [vmem:[#allocation2] sm:$0xff] %v242
    %305 = vst [vmem:[#allocation2 + $0x8] sm:$0xff] %v245
    %306 = vst [vmem:[#allocation2 + $0x10] sm:$0xff] %v250
    %307 = vst [vmem:[#allocation2 + $0x18] sm:$0xff] %v253
    %308 = vst [vmem:[#allocation2 + $0x20] sm:$0xff] %v258
    %309 = vst [vmem:[#allocation2 + $0x28] sm:$0xff] %v261
    %310 = vst [vmem:[#allocation2 + $0x30] sm:$0xff] %v266
    %311 = vst [vmem:[#allocation2 + $0x38] sm:$0xff] %v269
    %312 = vst [vmem:[#allocation2 + $0x40] sm:$0xff] %v274
    %313 = vst [vmem:[#allocation2 + $0x48] sm:$0xff] %v277
    %314 = vst [vmem:[#allocation2 + $0x50] sm:$0xff] %v282
    %315 = vst [vmem:[#allocation2 + $0x58] sm:$0xff] %v285
    %316 = vst [vmem:[#allocation2 + $0x60] sm:$0xff] %v290
    %317 = vst [vmem:[#allocation2 + $0x68] sm:$0xff] %v293
    %318 = vst [vmem:[#allocation2 + $0x70] sm:$0xff] %v298
    %319 = vst [vmem:[#allocation2 + $0x78] sm:$0xff] %v301
    %v320 = vld [vmem:[%s1] sm:$0xf]
    %v321 = vld [vmem:[%s1 + $0x4] sm:$0xf]
    %v322 = vld [vmem:[%s1 + $0x8] sm:$0xf]
    %v323 = vld [vmem:[%s1 + $0xc] sm:$0xf]
    %v324 = vld [vmem:[%s1 + $0x10] sm:$0xf]
    %v325 = vld [vmem:[%s1 + $0x14] sm:$0xf]
    %v326 = vld [vmem:[%s1 + $0x18] sm:$0xf]
    %v327 = vld [vmem:[%s1 + $0x1c] sm:$0xf]
    %v328 = vld [vmem:[%s1 + $0x20] sm:$0xf]
    %v329 = vld [vmem:[%s1 + $0x24] sm:$0xf]
    %v330 = vld [vmem:[%s1 + $0x28] sm:$0xf]
    %v331 = vld [vmem:[%s1 + $0x2c] sm:$0xf]
    %v332 = vld [vmem:[%s1 + $0x30] sm:$0xf]
    %v333 = vld [vmem:[%s1 + $0x34] sm:$0xf]
    %v334 = vld [vmem:[%s1 + $0x38] sm:$0xf]
    %v335 = vld [vmem:[%s1 + $0x3c] sm:$0xf]
    %v336 = vld [vmem:[#allocation2] sm:$0xff]
    %v337 = vld [vmem:[#allocation2 + $0x8] sm:$0xff]
    %v338 = vld [vmem:[#allocation2 + $0x10] sm:$0xff]
    %v339 = vld [vmem:[#allocation2 + $0x18] sm:$0xff]
    %v340 = vld [vmem:[#allocation2 + $0x20] sm:$0xff]
    %v341 = vld [vmem:[#allocation2 + $0x28] sm:$0xff]
    %v342 = vld [vmem:[#allocation2 + $0x30] sm:$0xff]
    %v343 = vld [vmem:[#allocation2 + $0x38] sm:$0xff]
    %v344 = vld [vmem:[#allocation2 + $0x40] sm:$0xff]
    %v345 = vld [vmem:[#allocation2 + $0x48] sm:$0xff]
    %v346 = vld [vmem:[#allocation2 + $0x50] sm:$0xff]
    %v347 = vld [vmem:[#allocation2 + $0x58] sm:$0xff]
    %v348 = vld [vmem:[#allocation2 + $0x60] sm:$0xff]
    %v349 = vld [vmem:[#allocation2 + $0x68] sm:$0xff]
    %v350 = vld [vmem:[#allocation2 + $0x70] sm:$0xff]
    %v351 = vld [vmem:[#allocation2 + $0x78] sm:$0xff]
    %v352 = vpack.c.bf16 %v337, %v336
    %v353 = vpack.c.bf16 %v339, %v338
    %v354 = vpack.c.bf16 %v341, %v340
    %v355 = vpack.c.bf16 %v343, %v342
    %v356 = vpack.c.bf16 %v345, %v344
    %v357 = vpack.c.bf16 %v347, %v346
    %v358 = vpack.c.bf16 %v349, %v348
    %v359 = vpack.c.bf16 %v351, %v350
    %s360 = sld [smem:[#allocation3 + $0x2]]
    %v361 = vld [vmem:[%s3] sm:$0xff]
    %v362 = vld [vmem:[%s3 + $0x8] sm:$0xff]
    %v363 = vld [vmem:[%s3 + $0x10] sm:$0xff]
    %v364 = vld [vmem:[%s3 + $0x18] sm:$0xff]
    %v365 = vld [vmem:[%s3 + $0x20] sm:$0xff]
    %v366 = vld [vmem:[%s3 + $0x28] sm:$0xff]
    %v367 = vld [vmem:[%s3 + $0x30] sm:$0xff]
    %v368 = vld [vmem:[%s3 + $0x38] sm:$0xff]
    %v369 = vld [vmem:[%s3 + $0x40] sm:$0xff]
    %v370 = vld [vmem:[%s3 + $0x48] sm:$0xff]
    %v371 = vld [vmem:[%s3 + $0x50] sm:$0xff]
    %v372 = vld [vmem:[%s3 + $0x58] sm:$0xff]
    %v373 = vld [vmem:[%s3 + $0x60] sm:$0xff]
    %v374 = vld [vmem:[%s3 + $0x68] sm:$0xff]
    %v375 = vld [vmem:[%s3 + $0x70] sm:$0xff]
    %v376 = vld [vmem:[%s3 + $0x78] sm:$0xff]
    %v377 = vstv %s360
    %v378 = vmul.f32 %v377, %v361
    %v379 = vmul.f32 %v377, %v362
    %v380 = vmul.f32 %v377, %v363
    %v381 = vmul.f32 %v377, %v364
    %v382 = vmul.f32 %v377, %v365
    %v383 = vmul.f32 %v377, %v366
    %v384 = vmul.f32 %v377, %v367
    %v385 = vmul.f32 %v377, %v368
    %v386 = vmul.f32 %v377, %v369
    %v387 = vmul.f32 %v377, %v370
    %v388 = vmul.f32 %v377, %v371
    %v389 = vmul.f32 %v377, %v372
    %v390 = vmul.f32 %v377, %v373
    %v391 = vmul.f32 %v377, %v374
    %v392 = vmul.f32 %v377, %v375
    %v393 = vmul.f32 %v377, %v376
    %v410 = vunpack.c.l.b16 %v320
    %v411 = vunpack.c.l.b16 %v321
    %v412 = vunpack.c.l.b16 %v322
    %v413 = vunpack.c.l.b16 %v323
    %v414 = vunpack.c.l.b16 %v324
    %v415 = vunpack.c.l.b16 %v325
    %v416 = vunpack.c.l.b16 %v326
    %v417 = vunpack.c.l.b16 %v327
    %v418 = vunpack.c.l.b16 %v328
    %v419 = vunpack.c.l.b16 %v329
    %v420 = vunpack.c.l.b16 %v330
    %v421 = vunpack.c.l.b16 %v331
    %v422 = vunpack.c.l.b16 %v332
    %v423 = vunpack.c.l.b16 %v333
    %v424 = vunpack.c.l.b16 %v334
    %v425 = vunpack.c.l.b16 %v335
    %v426 = vpack.c.b16 %v411, %v410
    %v427 = vpack.c.b16 %v413, %v412
    %v428 = vpack.c.b16 %v415, %v414
    %v429 = vpack.c.b16 %v417, %v416
    %v430 = vpack.c.b16 %v419, %v418
    %v431 = vpack.c.b16 %v421, %v420
    %v432 = vpack.c.b16 %v423, %v422
    %v433 = vpack.c.b16 %v425, %v424
    %442 = vmatprep.subr.bf16.mxu0 0
    %443 = vmatpush1.bf16.msra.mxu0 %v352
    %444 = vmatprep.subr.bf16.mxu0 0
    %445 = vmatpush1.bf16.msra.mxu0 %v353
    %446 = vmatprep.subr.bf16.mxu0 0
    %447 = vmatpush1.bf16.msra.mxu0 %v354
    %448 = vmatprep.subr.bf16.mxu0 0
    %449 = vmatpush1.bf16.msra.mxu0 %v355
    %450 = vmatprep.subr.bf16.mxu0 0
    %451 = vmatpush1.bf16.msra.mxu0 %v356
    %452 = vmatprep.subr.bf16.mxu0 0
    %453 = vmatpush1.bf16.msra.mxu0 %v357
    %454 = vmatprep.subr.bf16.mxu0 0
    %455 = vmatpush1.bf16.msra.mxu0 %v358
    %456 = vmatprep.subr.bf16.mxu0 0
    %457 = vmatpush1.bf16.msra.mxu0 %v359
    %458 = vmatprep.subr.bf16.mxu0 0
    %459 = vmatpush1.bf16.msra.mxu0 0
    %460 = vmatprep.subr.bf16.mxu0 0
    %461 = vmatpush1.bf16.msra.mxu0 0
    %462 = vmatprep.subr.bf16.mxu0 0
    %463 = vmatpush1.bf16.msra.mxu0 0
    %464 = vmatprep.subr.bf16.mxu0 0
    %465 = vmatpush1.bf16.msra.mxu0 0
    %466 = vmatprep.subr.bf16.mxu0 0
    %467 = vmatpush1.bf16.msra.mxu0 0
    %468 = vmatprep.subr.bf16.mxu0 0
    %469 = vmatpush1.bf16.msra.mxu0 0
    %470 = vmatprep.subr.bf16.mxu0 0
    %471 = vmatpush1.bf16.msra.mxu0 0
    %472 = vmatprep.subr.bf16.mxu0 0
    %473 = vmatpush1.bf16.msra.mxu0 0
    %474 = vmatprep.mubr.bf16.mxu0 0
    %475 = vmatmul.mubr.bf16.gmra.mrb[0].mxu0 %v426
    %v476 = vpop.f32.mrb[0].mxu0
    %v477 = vadd.f32 %v378, %v476
    %v478 = vpop.f32.mrb[0].mxu0
    %v479 = vpop.f32.mrb[0].mxu0
    %v480 = vadd.f32 %v379, %v479
    %v481 = vpop.f32.mrb[0].mxu0
    %482 = vmatprep.mubr.bf16.mxu0 0
    %483 = vmatmul.mubr.bf16.gmra.mrb[0].mxu0 %v427
    %v484 = vpop.f32.mrb[0].mxu0
    %v485 = vadd.f32 %v380, %v484
    %v486 = vpop.f32.mrb[0].mxu0
    %v487 = vpop.f32.mrb[0].mxu0
    %v488 = vadd.f32 %v381, %v487
    %v489 = vpop.f32.mrb[0].mxu0
    %490 = vmatprep.mubr.bf16.mxu0 0
    %491 = vmatmul.mubr.bf16.gmra.mrb[0].mxu0 %v428
    %v492 = vpop.f32.mrb[0].mxu0
    %v493 = vadd.f32 %v382, %v492
    %v494 = vpop.f32.mrb[0].mxu0
    %v495 = vpop.f32.mrb[0].mxu0
    %v496 = vadd.f32 %v383, %v495
    %v497 = vpop.f32.mrb[0].mxu0
    %498 = vmatprep.mubr.bf16.mxu0 0
    %499 = vmatmul.mubr.bf16.gmra.mrb[0].mxu0 %v429
    %v500 = vpop.f32.mrb[0].mxu0
    %v501 = vadd.f32 %v384, %v500
    %v502 = vpop.f32.mrb[0].mxu0
    %v503 = vpop.f32.mrb[0].mxu0
    %v504 = vadd.f32 %v385, %v503
    %v505 = vpop.f32.mrb[0].mxu0
    %506 = vmatprep.mubr.bf16.mxu0 0
    %507 = vmatmul.mubr.bf16.gmra.mrb[0].mxu0 %v430
    %v508 = vpop.f32.mrb[0].mxu0
    %v509 = vadd.f32 %v386, %v508
    %v510 = vpop.f32.mrb[0].mxu0
    %v511 = vpop.f32.mrb[0].mxu0
    %v512 = vadd.f32 %v387, %v511
    %v513 = vpop.f32.mrb[0].mxu0
    %514 = vmatprep.mubr.bf16.mxu0 0
    %515 = vmatmul.mubr.bf16.gmra.mrb[0].mxu0 %v431
    %v516 = vpop.f32.mrb[0].mxu0
    %v517 = vadd.f32 %v388, %v516
    %v518 = vpop.f32.mrb[0].mxu0
    %v519 = vpop.f32.mrb[0].mxu0
    %v520 = vadd.f32 %v389, %v519
    %v521 = vpop.f32.mrb[0].mxu0
    %522 = vmatprep.mubr.bf16.mxu0 0
    %523 = vmatmul.mubr.bf16.gmra.mrb[0].mxu0 %v432
    %v524 = vpop.f32.mrb[0].mxu0
    %v525 = vadd.f32 %v390, %v524
    %v526 = vpop.f32.mrb[0].mxu0
    %v527 = vpop.f32.mrb[0].mxu0
    %v528 = vadd.f32 %v391, %v527
    %v529 = vpop.f32.mrb[0].mxu0
    %530 = vmatprep.mubr.bf16.mxu0 0
    %531 = vmatmul.mubr.bf16.gmra.mrb[0].mxu0 %v433
    %v532 = vpop.f32.mrb[0].mxu0
    %v533 = vadd.f32 %v392, %v532
    %v534 = vpop.f32.mrb[0].mxu0
    %v535 = vpop.f32.mrb[0].mxu0
    %v536 = vadd.f32 %v393, %v535
    %v537 = vpop.f32.mrb[0].mxu0
    %538 = vdwg.mxu0
    %539 = vst [vmem:[#allocation2] sm:$0xff] %v477
    %540 = vst [vmem:[#allocation2 + $0x8] sm:$0xff] %v480
    %541 = vst [vmem:[#allocation2 + $0x10] sm:$0xff] %v485
    %542 = vst [vmem:[#allocation2 + $0x18] sm:$0xff] %v488
    %543 = vst [vmem:[#allocation2 + $0x20] sm:$0xff] %v493
    %544 = vst [vmem:[#allocation2 + $0x28] sm:$0xff] %v496
    %545 = vst [vmem:[#allocation2 + $0x30] sm:$0xff] %v501
    %546 = vst [vmem:[#allocation2 + $0x38] sm:$0xff] %v504
    %547 = vst [vmem:[#allocation2 + $0x40] sm:$0xff] %v509
    %548 = vst [vmem:[#allocation2 + $0x48] sm:$0xff] %v512
    %549 = vst [vmem:[#allocation2 + $0x50] sm:$0xff] %v517
    %550 = vst [vmem:[#allocation2 + $0x58] sm:$0xff] %v520
    %551 = vst [vmem:[#allocation2 + $0x60] sm:$0xff] %v525
    %552 = vst [vmem:[#allocation2 + $0x68] sm:$0xff] %v528
    %553 = vst [vmem:[#allocation2 + $0x70] sm:$0xff] %v533
    %554 = vst [vmem:[#allocation2 + $0x78] sm:$0xff] %v536
    %v555 = vld [vmem:[%s1] sm:$0xf]
    %v556 = vld [vmem:[%s1 + $0x4] sm:$0xf]
    %v557 = vld [vmem:[%s1 + $0x8] sm:$0xf]
    %v558 = vld [vmem:[%s1 + $0xc] sm:$0xf]
    %v559 = vld [vmem:[%s1 + $0x10] sm:$0xf]
    %v560 = vld [vmem:[%s1 + $0x14] sm:$0xf]
    %v561 = vld [vmem:[%s1 + $0x18] sm:$0xf]
    %v562 = vld [vmem:[%s1 + $0x1c] sm:$0xf]
    %v563 = vld [vmem:[%s1 + $0x20] sm:$0xf]
    %v564 = vld [vmem:[%s1 + $0x24] sm:$0xf]
    %v565 = vld [vmem:[%s1 + $0x28] sm:$0xf]
    %v566 = vld [vmem:[%s1 + $0x2c] sm:$0xf]
    %v567 = vld [vmem:[%s1 + $0x30] sm:$0xf]
    %v568 = vld [vmem:[%s1 + $0x34] sm:$0xf]
    %v569 = vld [vmem:[%s1 + $0x38] sm:$0xf]
    %v570 = vld [vmem:[%s1 + $0x3c] sm:$0xf]
    %v571 = vld [vmem:[#allocation2] sm:$0xff]
    %v572 = vld [vmem:[#allocation2 + $0x8] sm:$0xff]
    %v573 = vld [vmem:[#allocation2 + $0x10] sm:$0xff]
    %v574 = vld [vmem:[#allocation2 + $0x18] sm:$0xff]
    %v575 = vld [vmem:[#allocation2 + $0x20] sm:$0xff]
    %v576 = vld [vmem:[#allocation2 + $0x28] sm:$0xff]
    %v577 = vld [vmem:[#allocation2 + $0x30] sm:$0xff]
    %v578 = vld [vmem:[#allocation2 + $0x38] sm:$0xff]
    %v579 = vld [vmem:[#allocation2 + $0x40] sm:$0xff]
    %v580 = vld [vmem:[#allocation2 + $0x48] sm:$0xff]
    %v581 = vld [vmem:[#allocation2 + $0x50] sm:$0xff]
    %v582 = vld [vmem:[#allocation2 + $0x58] sm:$0xff]
    %v583 = vld [vmem:[#allocation2 + $0x60] sm:$0xff]
    %v584 = vld [vmem:[#allocation2 + $0x68] sm:$0xff]
    %v585 = vld [vmem:[#allocation2 + $0x70] sm:$0xff]
    %v586 = vld [vmem:[#allocation2 + $0x78] sm:$0xff]
    %v587 = vpack.c.bf16 %v572, %v571
    %v588 = vpack.c.bf16 %v574, %v573
    %v589 = vpack.c.bf16 %v576, %v575
    %v590 = vpack.c.bf16 %v578, %v577
    %v591 = vpack.c.bf16 %v580, %v579
    %v592 = vpack.c.bf16 %v582, %v581
    %v593 = vpack.c.bf16 %v584, %v583
    %v594 = vpack.c.bf16 %v586, %v585
    %s595 = sld [smem:[#allocation3 + $0x3]]
    %v596 = vld [vmem:[%s3] sm:$0xff]
    %v597 = vld [vmem:[%s3 + $0x8] sm:$0xff]
    %v598 = vld [vmem:[%s3 + $0x10] sm:$0xff]
    %v599 = vld [vmem:[%s3 + $0x18] sm:$0xff]
    %v600 = vld [vmem:[%s3 + $0x20] sm:$0xff]
    %v601 = vld [vmem:[%s3 + $0x28] sm:$0xff]
    %v602 = vld [vmem:[%s3 + $0x30] sm:$0xff]
    %v603 = vld [vmem:[%s3 + $0x38] sm:$0xff]
    %v604 = vld [vmem:[%s3 + $0x40] sm:$0xff]
    %v605 = vld [vmem:[%s3 + $0x48] sm:$0xff]
    %v606 = vld [vmem:[%s3 + $0x50] sm:$0xff]
    %v607 = vld [vmem:[%s3 + $0x58] sm:$0xff]
    %v608 = vld [vmem:[%s3 + $0x60] sm:$0xff]
    %v609 = vld [vmem:[%s3 + $0x68] sm:$0xff]
    %v610 = vld [vmem:[%s3 + $0x70] sm:$0xff]
    %v611 = vld [vmem:[%s3 + $0x78] sm:$0xff]
    %v612 = vstv %s595
    %v613 = vmul.f32 %v612, %v596
    %v614 = vmul.f32 %v612, %v597
    %v615 = vmul.f32 %v612, %v598
    %v616 = vmul.f32 %v612, %v599
    %v617 = vmul.f32 %v612, %v600
    %v618 = vmul.f32 %v612, %v601
    %v619 = vmul.f32 %v612, %v602
    %v620 = vmul.f32 %v612, %v603
    %v621 = vmul.f32 %v612, %v604
    %v622 = vmul.f32 %v612, %v605
    %v623 = vmul.f32 %v612, %v606
    %v624 = vmul.f32 %v612, %v607
    %v625 = vmul.f32 %v612, %v608
    %v626 = vmul.f32 %v612, %v609
    %v627 = vmul.f32 %v612, %v610
    %v628 = vmul.f32 %v612, %v611
    %v645 = vunpack.c.l.b16 %v555
    %v646 = vunpack.c.l.b16 %v556
    %v647 = vunpack.c.l.b16 %v557
    %v648 = vunpack.c.l.b16 %v558
    %v649 = vunpack.c.l.b16 %v559
    %v650 = vunpack.c.l.b16 %v560
    %v651 = vunpack.c.l.b16 %v561
    %v652 = vunpack.c.l.b16 %v562
    %v653 = vunpack.c.l.b16 %v563
    %v654 = vunpack.c.l.b16 %v564
    %v655 = vunpack.c.l.b16 %v565
    %v656 = vunpack.c.l.b16 %v566
    %v657 = vunpack.c.l.b16 %v567
    %v658 = vunpack.c.l.b16 %v568
    %v659 = vunpack.c.l.b16 %v569
    %v660 = vunpack.c.l.b16 %v570
    %v661 = vpack.c.b16 %v646, %v645
    %v662 = vpack.c.b16 %v648, %v647
    %v663 = vpack.c.b16 %v650, %v649
    %v664 = vpack.c.b16 %v652, %v651
    %v665 = vpack.c.b16 %v654, %v653
    %v666 = vpack.c.b16 %v656, %v655
    %v667 = vpack.c.b16 %v658, %v657
    %v668 = vpack.c.b16 %v660, %v659
    %677 = vmatprep.subr.bf16.mxu0 0
    %678 = vmatpush1.bf16.msra.mxu0 %v587
    %679 = vmatprep.subr.bf16.mxu0 0
    %680 = vmatpush1.bf16.msra.mxu0 %v588
    %681 = vmatprep.subr.bf16.mxu0 0
    %682 = vmatpush1.bf16.msra.mxu0 %v589
    %683 = vmatprep.subr.bf16.mxu0 0
    %684 = vmatpush1.bf16.msra.mxu0 %v590
    %685 = vmatprep.subr.bf16.mxu0 0
    %686 = vmatpush1.bf16.msra.mxu0 %v591
    %687 = vmatprep.subr.bf16.mxu0 0
    %688 = vmatpush1.bf16.msra.mxu0 %v592
    %689 = vmatprep.subr.bf16.mxu0 0
    %690 = vmatpush1.bf16.msra.mxu0 %v593
    %691 = vmatprep.subr.bf16.mxu0 0
    %692 = vmatpush1.bf16.msra.mxu0 %v594
    %693 = vmatprep.subr.bf16.mxu0 0
    %694 = vmatpush1.bf16.msra.mxu0 0
    %695 = vmatprep.subr.bf16.mxu0 0
    %696 = vmatpush1.bf16.msra.mxu0 0
    %697 = vmatprep.subr.bf16.mxu0 0
    %698 = vmatpush1.bf16.msra.mxu0 0
    %699 = vmatprep.subr.bf16.mxu0 0
    %700 = vmatpush1.bf16.msra.mxu0 0
    %701 = vmatprep.subr.bf16.mxu0 0
    %702 = vmatpush1.bf16.msra.mxu0 0
    %703 = vmatprep.subr.bf16.mxu0 0
    %704 = vmatpush1.bf16.msra.mxu0 0
    %705 = vmatprep.subr.bf16.mxu0 0
    %706 = vmatpush1.bf16.msra.mxu0 0
    %707 = vmatprep.subr.bf16.mxu0 0
    %708 = vmatpush1.bf16.msra.mxu0 0
    %709 = vmatprep.mubr.bf16.mxu0 0
    %710 = vmatmul.mubr.bf16.gmra.mrb[0].mxu0 %v661
    %v711 = vpop.f32.mrb[0].mxu0
    %v712 = vadd.f32 %v613, %v711
    %v713 = vpop.f32.mrb[0].mxu0
    %v714 = vpop.f32.mrb[0].mxu0
    %v715 = vadd.f32 %v614, %v714
    %v716 = vpop.f32.mrb[0].mxu0
    %717 = vmatprep.mubr.bf16.mxu0 0
    %718 = vmatmul.mubr.bf16.gmra.mrb[0].mxu0 %v662
    %v719 = vpop.f32.mrb[0].mxu0
    %v720 = vadd.f32 %v615, %v719
    %v721 = vpop.f32.mrb[0].mxu0
    %v722 = vpop.f32.mrb[0].mxu0
    %v723 = vadd.f32 %v616, %v722
    %v724 = vpop.f32.mrb[0].mxu0
    %725 = vmatprep.mubr.bf16.mxu0 0
    %726 = vmatmul.mubr.bf16.gmra.mrb[0].mxu0 %v663
    %v727 = vpop.f32.mrb[0].mxu0
    %v728 = vadd.f32 %v617, %v727
    %v729 = vpop.f32.mrb[0].mxu0
    %v730 = vpop.f32.mrb[0].mxu0
    %v731 = vadd.f32 %v618, %v730
    %v732 = vpop.f32.mrb[0].mxu0
    %733 = vmatprep.mubr.bf16.mxu0 0
    %734 = vmatmul.mubr.bf16.gmra.mrb[0].mxu0 %v664
    %v735 = vpop.f32.mrb[0].mxu0
    %v736 = vadd.f32 %v619, %v735
    %v737 = vpop.f32.mrb[0].mxu0
    %v738 = vpop.f32.mrb[0].mxu0
    %v739 = vadd.f32 %v620, %v738
    %v740 = vpop.f32.mrb[0].mxu0
    %741 = vmatprep.mubr.bf16.mxu0 0
    %742 = vmatmul.mubr.bf16.gmra.mrb[0].mxu0 %v665
    %v743 = vpop.f32.mrb[0].mxu0
    %v744 = vadd.f32 %v621, %v743
    %v745 = vpop.f32.mrb[0].mxu0
    %v746 = vpop.f32.mrb[0].mxu0
    %v747 = vadd.f32 %v622, %v746
    %v748 = vpop.f32.mrb[0].mxu0
    %749 = vmatprep.mubr.bf16.mxu0 0
    %750 = vmatmul.mubr.bf16.gmra.mrb[0].mxu0 %v666
    %v751 = vpop.f32.mrb[0].mxu0
    %v752 = vadd.f32 %v623, %v751
    %v753 = vpop.f32.mrb[0].mxu0
    %v754 = vpop.f32.mrb[0].mxu0
    %v755 = vadd.f32 %v624, %v754
    %v756 = vpop.f32.mrb[0].mxu0
    %757 = vmatprep.mubr.bf16.mxu0 0
    %758 = vmatmul.mubr.bf16.gmra.mrb[0].mxu0 %v667
    %v759 = vpop.f32.mrb[0].mxu0
    %v760 = vadd.f32 %v625, %v759
    %v761 = vpop.f32.mrb[0].mxu0
    %v762 = vpop.f32.mrb[0].mxu0
    %v763 = vadd.f32 %v626, %v762
    %v764 = vpop.f32.mrb[0].mxu0
    %765 = vmatprep.mubr.bf16.mxu0 0
    %766 = vmatmul.mubr.bf16.gmra.mrb[0].mxu0 %v668
    %v767 = vpop.f32.mrb[0].mxu0
    %v768 = vadd.f32 %v627, %v767
    %v769 = vpop.f32.mrb[0].mxu0
    %v770 = vpop.f32.mrb[0].mxu0
    %v771 = vadd.f32 %v628, %v770
    %v772 = vpop.f32.mrb[0].mxu0
    %773 = vdwg.mxu0
    %774 = vst [vmem:[#allocation2] sm:$0xff] %v712
    %775 = vst [vmem:[#allocation2 + $0x8] sm:$0xff] %v715
    %776 = vst [vmem:[#allocation2 + $0x10] sm:$0xff] %v720
    %777 = vst [vmem:[#allocation2 + $0x18] sm:$0xff] %v723
    %778 = vst [vmem:[#allocation2 + $0x20] sm:$0xff] %v728
    %779 = vst [vmem:[#allocation2 + $0x28] sm:$0xff] %v731
    %780 = vst [vmem:[#allocation2 + $0x30] sm:$0xff] %v736
    %781 = vst [vmem:[#allocation2 + $0x38] sm:$0xff] %v739
    %782 = vst [vmem:[#allocation2 + $0x40] sm:$0xff] %v744
    %783 = vst [vmem:[#allocation2 + $0x48] sm:$0xff] %v747
    %784 = vst [vmem:[#allocation2 + $0x50] sm:$0xff] %v752
    %785 = vst [vmem:[#allocation2 + $0x58] sm:$0xff] %v755
    %786 = vst [vmem:[#allocation2 + $0x60] sm:$0xff] %v760
    %787 = vst [vmem:[#allocation2 + $0x68] sm:$0xff] %v763
    %788 = vst [vmem:[#allocation2 + $0x70] sm:$0xff] %v768
    %789 = vst [vmem:[#allocation2 + $0x78] sm:$0xff] %v771
    %v790 = vld [vmem:[%s2] sm:$0xf]
    %v791 = vld [vmem:[#allocation2] sm:$0xff]
    %v792 = vld [vmem:[#allocation2 + $0x8] sm:$0xff]
    %v793 = vld [vmem:[#allocation2 + $0x10] sm:$0xff]
    %v794 = vld [vmem:[#allocation2 + $0x18] sm:$0xff]
    %v795 = vld [vmem:[#allocation2 + $0x20] sm:$0xff]
    %v796 = vld [vmem:[#allocation2 + $0x28] sm:$0xff]
    %v797 = vld [vmem:[#allocation2 + $0x30] sm:$0xff]
    %v798 = vld [vmem:[#allocation2 + $0x38] sm:$0xff]
    %v799 = vld [vmem:[#allocation2 + $0x40] sm:$0xff]
    %v800 = vld [vmem:[#allocation2 + $0x48] sm:$0xff]
    %v801 = vld [vmem:[#allocation2 + $0x50] sm:$0xff]
    %v802 = vld [vmem:[#allocation2 + $0x58] sm:$0xff]
    %v803 = vld [vmem:[#allocation2 + $0x60] sm:$0xff]
    %v804 = vld [vmem:[#allocation2 + $0x68] sm:$0xff]
    %v805 = vld [vmem:[#allocation2 + $0x70] sm:$0xff]
    %v806 = vld [vmem:[#allocation2 + $0x78] sm:$0xff]
    %v807 = vpack.c.bf16 %v792, %v791
    %v808 = vpack.c.bf16 %v794, %v793
    %v809 = vpack.c.bf16 %v796, %v795
    %v810 = vpack.c.bf16 %v798, %v797
    %v811 = vpack.c.bf16 %v800, %v799
    %v812 = vpack.c.bf16 %v802, %v801
    %v813 = vpack.c.bf16 %v804, %v803
    %v814 = vpack.c.bf16 %v806, %v805
    %s815 = sld [smem:[#allocation3 + $0x4]]
    %v816 = vld [vmem:[%s4] sm:$0xff]
    %v817 = vstv %s815
    %v818 = vmul.f32 %v817, %v816
    %819 = vmatprep.subr.bf16.mxu0 0
    %820 = vmatpush1.bf16.msra.mxu0 %v807
    %821 = vmatprep.subr.bf16.mxu0 0
    %822 = vmatpush1.bf16.msra.mxu0 %v808
    %823 = vmatprep.subr.bf16.mxu0 0
    %824 = vmatpush1.bf16.msra.mxu0 %v809
    %825 = vmatprep.subr.bf16.mxu0 0
    %826 = vmatpush1.bf16.msra.mxu0 %v810
    %827 = vmatprep.subr.bf16.mxu0 0
    %828 = vmatpush1.bf16.msra.mxu0 %v811
    %829 = vmatprep.subr.bf16.mxu0 0
    %830 = vmatpush1.bf16.msra.mxu0 %v812
    %831 = vmatprep.subr.bf16.mxu0 0
    %832 = vmatpush1.bf16.msra.mxu0 %v813
    %833 = vmatprep.subr.bf16.mxu0 0
    %834 = vmatpush1.bf16.msra.mxu0 %v814
    %835 = vmatprep.subr.bf16.mxu0 0
    %836 = vmatpush1.bf16.msra.mxu0 0
    %837 = vmatprep.subr.bf16.mxu0 0
    %838 = vmatpush1.bf16.msra.mxu0 0
    %839 = vmatprep.subr.bf16.mxu0 0
    %840 = vmatpush1.bf16.msra.mxu0 0
    %841 = vmatprep.subr.bf16.mxu0 0
    %842 = vmatpush1.bf16.msra.mxu0 0
    %843 = vmatprep.subr.bf16.mxu0 0
    %844 = vmatpush1.bf16.msra.mxu0 0
    %845 = vmatprep.subr.bf16.mxu0 0
    %846 = vmatpush1.bf16.msra.mxu0 0
    %847 = vmatprep.subr.bf16.mxu0 0
    %848 = vmatpush1.bf16.msra.mxu0 0
    %849 = vmatprep.subr.bf16.mxu0 0
    %850 = vmatpush1.bf16.msra.mxu0 0
    %851 = vmatprep.mubr.bf16.mxu0 0
    %852 = vmatmul.mubr.bf16.gmra.mrb[0].mxu0 %v790
    %v853 = vpop.f32.mrb[0].mxu0
    %v854 = vadd.f32 %v818, %v853
    %v855 = vpop.f32.mrb[0].mxu0
    %v856 = vpop.f32.mrb[0].mxu0
    %v857 = vpop.f32.mrb[0].mxu0
    %858 = vdwg.mxu0
    %859 = vst [vmem:[#allocation6] sm:$0xff] %v854
    // Predicated region
    $region26: #{diffusion_iteration_forward.1} parent=1 // pred_check
      _
    $region27: #{diffusion_iteration_forward.1} parent=1 // pred_check_branch
      %861 = sbr.rel (0) target = $region29
    $region28: #{diffusion_iteration_forward.1} parent=1 // pred_region
      %s863 = ssub.s32 128, 128
      %864 = vsyncadd [#allocation4], %s863
      %s866 = sshll.u32 [#allocation6], 4
      %s867 = int_to_ptr.vmem [resolvable:$true] %s866
      %869 = dma.vmem_to_hbm [thread:$0]  %s867, 128, %s5, [#allocation4]
    $region29: #{diffusion_iteration_forward.1} parent=1 // pred_fallthru
      _
    // Predicated region
    $region30: #{diffusion_iteration_forward.1} parent=1 // pred_check
      _
    $region31: #{diffusion_iteration_forward.1} parent=1 // pred_check_branch
      %871 = sbr.rel (0) target = $region33
    $region32: #{diffusion_iteration_forward.1} parent=1 // pred_region
      %872 = dma.done [#allocation4], 128
    $region33: #{diffusion_iteration_forward.1} parent=1 // pred_fallthru
      _
    %873 = vsyncpa [#allocation4], 1
    %874 = vsyncpa [#allocation5], 1

</llo_original>
